<compile_context>
chip_gen: v7x
topology: tpu7x:2x2x1
jax: 0.10.0
libtpu: 0.0.40
codegen_flags: <defaults>
</compile_context>

<pallas_src>
import jax
import jax.numpy as jnp
from jax.experimental import pallas as pl
from jax.experimental.pallas import tpu as pltpu

_LANES = 128
_TB_MAX = 1024   # batch rows per grid step


def _round_up(n, m):
    return ((n + m - 1) // m) * m


def _choose_batch_tiling(B, tb_max=_TB_MAX):
    """Pick (TB, B_pad).

    Pad the batch only to a sublane multiple (8), then choose the largest tile
    TB (multiple of 8) that divides the padded batch exactly, stays <= tb_max,
    and leaves >= 2 grid steps whenever possible (so v7x's two TensorCores both
    get work; on v5e/v6e extra steps are nearly free at these tile sizes).
    """
    B8 = _round_up(max(B, 1), 8)
    n8 = B8 // 8
    if n8 <= 1:
        return B8, B8
    best = 8  # always valid: >= 2 steps, <= tb_max
    for d in range(1, n8 + 1):
        if n8 % d == 0:
            tb = d * 8
            if tb <= tb_max and (B8 // tb) >= 2:
                best = max(best, tb)
    return best, B8


def actor_net_kernel(x_ref, w1_ref, w2_ref, w3_ref, b_ref, out_ref):
    h1p = w1_ref.shape[1]   # padded hidden1 width (static, == 128 here)
    h2p = w2_ref.shape[1]   # padded hidden2 width (static, == 128 here)
    ap = w3_ref.shape[1]    # padded action width (static, == 128 here)

    # fc_in + relu  (bf16 MXU operands, f32 accumulate, f32 elementwise)
    x = x_ref[...].astype(jnp.bfloat16)
    h1 = jnp.dot(x, w1_ref[...], preferred_element_type=jnp.float32)
    h1 = jnp.maximum(h1 + b_ref[0:1, :h1p], 0.0)

    # fc1 + relu
    h2 = jnp.dot(h1.astype(jnp.bfloat16), w2_ref[...],
                 preferred_element_type=jnp.float32)
    h2 = jnp.maximum(h2 + b_ref[1:2, :h2p], 0.0)

    # fc_out + tanh (tanh in f32, store in out_ref.dtype -- bf16 by default to
    # halve the HBM writeback, which is the binding resource at large B)
    y = jnp.dot(h2.astype(jnp.bfloat16), w3_ref[...],
                preferred_element_type=jnp.float32)
    out_ref[...] = jnp.tanh(y + b_ref[2:3, :ap]).astype(out_ref.dtype)


def prepare_actor_params(params):
    """One-time prep: pad all layer widths to multiples of 128 lanes, cast
    weights to bf16, and pack the three biases into a single (8, W) f32 buffer
    (all widths are 128 here, so every b_ref row read is a full unmasked lane
    load).  Call once and reuse across forward calls."""
    w1, b1 = params["w1"], params["b1"]
    w2, b2 = params["w2"], params["b2"]
    w3, b3 = params["w3"], params["b3"]
    s = w1.shape[0]
    h1, h2, a = w1.shape[1], w2.shape[1], w3.shape[1]
    h1p = _round_up(h1, _LANES)
    h2p = _round_up(h2, _LANES)
    ap = _round_up(a, _LANES)

    w1p = jnp.zeros((s, h1p), jnp.float32).at[:, :h1].set(w1).astype(jnp.bfloat16)
    w2p = jnp.zeros((h1p, h2p), jnp.float32).at[:h1, :h2].set(w2).astype(jnp.bfloat16)
    w3p = jnp.zeros((h2p, ap), jnp.float32).at[:h2, :a].set(w3).astype(jnp.bfloat16)

    wmax = max(h1p, h2p, ap)
    bias = jnp.zeros((8, wmax), jnp.float32)
    bias = bias.at[0, :h1].set(b1.reshape(-1))
    bias = bias.at[1, :h2].set(b2.reshape(-1))
    bias = bias.at[2, :a].set(b3.reshape(-1))

    return {"w1": w1p, "w2": w2p, "w3": w3p, "bias": bias, "action_size": a}


def actor_net_forward(x, prepared, *, out_dtype=jnp.bfloat16, slice_output=True):
    """x: (B, state_size) float32.  prepared: output of prepare_actor_params.

    Returns (B, action_size) in out_dtype, or the padded lane-dense
    (B_pad, 128) buffer if slice_output=False (lets the consumer skip the
    wrapper slice / re-read entirely)."""
    w1p, w2p, w3p = prepared["w1"], prepared["w2"], prepared["w3"]
    bias = prepared["bias"]
    action_size = prepared["action_size"]

    B, S = x.shape
    ap = w3p.shape[1]

    TB, B_pad = _choose_batch_tiling(B)
    if B_pad != B:
        x = jnp.pad(x, ((0, B_pad - B), (0, 0)))

    grid = (B_pad // TB,)

    out = pl.pallas_call(
        actor_net_kernel,
        out_shape=jax.ShapeDtypeStruct((B_pad, ap), out_dtype),
        grid=grid,
        in_specs=[
            pl.BlockSpec((TB, S), lambda i: (i, 0)),          # x: tiled over batch
            pl.BlockSpec(w1p.shape, lambda i: (0, 0)),        # weights: VMEM-resident
            pl.BlockSpec(w2p.shape, lambda i: (0, 0)),
            pl.BlockSpec(w3p.shape, lambda i: (0, 0)),
            pl.BlockSpec(bias.shape, lambda i: (0, 0)),       # packed biases
        ],
        out_specs=pl.BlockSpec((TB, ap), lambda i: (i, 0)),   # lane-dense (128) out
        compiler_params=pltpu.CompilerParams(
            dimension_semantics=("parallel",)),
    )(x, w1p, w2p, w3p, bias)

    if slice_output:
        return out[:B, :action_size]
    return out


def init_actor_params(key, state_size, action_size, hidden_size1=128, hidden_size2=64):
    """Deterministic init mimicking nn.Linear's U(-1/sqrt(fan_in), 1/sqrt(fan_in))."""
    def linear(key, fan_in, fan_out):
        kw, kb = jax.random.split(key)
        bound = 1.0 / jnp.sqrt(fan_in)
        w = jax.random.uniform(kw, (fan_in, fan_out), jnp.float32, -bound, bound)
        b = jax.random.uniform(kb, (1, fan_out), jnp.float32, -bound, bound)
        return w, b

    k1, k2, k3 = jax.random.split(key, 3)
    w1, b1 = linear(k1, state_size, hidden_size1)
    w2, b2 = linear(k2, hidden_size1, hidden_size2)
    w3, b3 = linear(k3, hidden_size2, action_size)
    return {"w1": w1, "b1": b1, "w2": w2, "b2": b2, "w3": w3, "b3": b3}


def actor_net_ref_f32(x, p):
    h1 = jnp.maximum(x @ p["w1"] + p["b1"], 0.0)
    h2 = jnp.maximum(h1 @ p["w2"] + p["b2"], 0.0)
    return jnp.tanh(h2 @ p["w3"] + p["b3"])


def actor_net_ref_bf16(x, p):
    """Pure-JAX reference mimicking the kernel's bf16-operand / f32-accumulate path
    (final result left in f32; the kernel additionally rounds the store to bf16)."""
    bf = jnp.bfloat16
    h1 = jnp.dot(x.astype(bf), p["w1"].astype(bf), preferred_element_type=jnp.float32)
    h1 = jnp.maximum(h1 + p["b1"], 0.0)
    h2 = jnp.dot(h1.astype(bf), p["w2"].astype(bf), preferred_element_type=jnp.float32)
    h2 = jnp.maximum(h2 + p["b2"], 0.0)
    y = jnp.dot(h2.astype(bf), p["w3"].astype(bf), preferred_element_type=jnp.float32)
    return jnp.tanh(y + p["b3"])


if __name__ == "__main__":
    key = jax.random.PRNGKey(0)
    kx, kx2, kp = jax.random.split(key, 3)

    state_size = 8
    action_size = 4
    hidden_size1 = 128
    hidden_size2 = 64

    params = init_actor_params(kp, state_size, action_size, hidden_size1, hidden_size2)
    prepared = prepare_actor_params(params)   # prep once, reuse every call

    # Small RL-sized batch (grid=(1,), TB=8).
    batch = 2
    x = jax.random.normal(kx, (batch, state_size), jnp.float32)
    out = actor_net_forward(x, prepared)
    out = jax.block_until_ready(out)
    assert out.shape == (batch, action_size)

    out_f32 = out.astype(jnp.float32)
    ref_match = actor_net_ref_bf16(x, params)   # same matmul precision recipe as kernel
    ref_f32 = actor_net_ref_f32(x, params)      # full-f32 reference
    # bf16 output store adds at most ~4e-3 absolute error on tanh-range values.
    assert jnp.allclose(out_f32, ref_match, atol=1e-2, rtol=1e-2)
    assert jnp.allclose(out_f32, ref_f32, atol=5e-2, rtol=5e-2)

    # Larger, non-multiple batch: exercises minimal padding (300 -> 304) and a
    # multi-step grid (TB=152, grid=(2,)) so both v7x TensorCores get work.
    batch2 = 300
    x2 = jax.random.normal(kx2, (batch2, state_size), jnp.float32)
    out2 = jax.block_until_ready(actor_net_forward(x2, prepared))
    assert out2.shape == (batch2, action_size)
    assert jnp.allclose(out2.astype(jnp.float32), actor_net_ref_bf16(x2, params),
                        atol=1e-2, rtol=1e-2)
    assert jnp.allclose(out2.astype(jnp.float32), actor_net_ref_f32(x2, params),
                        atol=5e-2, rtol=5e-2)

    print("KERNEL_OK")
</pallas_src>

<mosaic_0001>
module attributes {stable_mosaic.version = 11 : i64} {
  func.func @actor_net_kernel(%arg0: i32, %arg1: memref<8x8xf32, #tpu.memory_space<vmem>>, %arg2: memref<8x128xbf16, #tpu.memory_space<vmem>>, %arg3: memref<128x128xbf16, #tpu.memory_space<vmem>>, %arg4: memref<128x128xbf16, #tpu.memory_space<vmem>>, %arg5: memref<8x128xf32, #tpu.memory_space<vmem>>, %arg6: memref<8x128xbf16, #tpu.memory_space<vmem>>) attributes {dimension_semantics = [#tpu.dimension_semantics<parallel>], iteration_bounds = array<i64: 1>, scalar_prefetch = 0 : i64, scratch_operands = 0 : i64, tpu.core_type = #tpu.core_type<tc>, window_params = [{transform_indices = @transform_0, window_bounds = array<i64: 8, 8>}, {pipeline_mode = #tpu.pipeline_mode<synchronous>, transform_indices = @transform_1, window_bounds = array<i64: 8, 128>}, {pipeline_mode = #tpu.pipeline_mode<synchronous>, transform_indices = @transform_2, window_bounds = array<i64: 128, 128>}, {pipeline_mode = #tpu.pipeline_mode<synchronous>, transform_indices = @transform_3, window_bounds = array<i64: 128, 128>}, {pipeline_mode = #tpu.pipeline_mode<synchronous>, transform_indices = @transform_4, window_bounds = array<i64: 8, 128>}, {transform_indices = @transform_5, window_bounds = array<i64: 8, 128>}]} {
    %c0 = arith.constant 0 : index
    %c0_0 = arith.constant 0 : index
    %0 = vector.load %arg1[%c0, %c0_0] : memref<8x8xf32, #tpu.memory_space<vmem>>, vector<8x8xf32>
    %1 = arith.truncf %0 : vector<8x8xf32> to vector<8x8xbf16>
    %c0_1 = arith.constant 0 : index
    %c0_2 = arith.constant 0 : index
    %2 = vector.load %arg2[%c0_1, %c0_2] : memref<8x128xbf16, #tpu.memory_space<vmem>>, vector<8x128xbf16>
    %cst = arith.constant dense<0.000000e+00> : vector<8x128xf32>
    %3 = tpu.matmul %1, %2, %cst {dimension_numbers = #tpu.dot_dimension_numbers<[1], [0], [0], [1], [0, 0, 1, 1], [], []>} : vector<8x8xbf16>, vector<8x128xbf16>, vector<8x128xf32> -> vector<8x128xf32>
    %c0_3 = arith.constant 0 : index
    %c0_4 = arith.constant 0 : index
    %4 = vector.load %arg5[%c0_3, %c0_4] : memref<8x128xf32, #tpu.memory_space<vmem>>, vector<1x128xf32>
    %5 = vector.broadcast %4 : vector<1x128xf32> to vector<8x128xf32>
    %6 = arith.addf %3, %5 : vector<8x128xf32>
    %cst_5 = arith.constant 0.000000e+00 : f32
    %7 = vector.broadcast %cst_5 : f32 to vector<8x128xf32>
    %8 = arith.maximumf %6, %7 : vector<8x128xf32>
    %9 = arith.truncf %8 : vector<8x128xf32> to vector<8x128xbf16>
    %c0_6 = arith.constant 0 : index
    %c0_7 = arith.constant 0 : index
    %10 = vector.load %arg3[%c0_6, %c0_7] : memref<128x128xbf16, #tpu.memory_space<vmem>>, vector<128x128xbf16>
    %cst_8 = arith.constant dense<0.000000e+00> : vector<8x128xf32>
    %11 = tpu.matmul %9, %10, %cst_8 {dimension_numbers = #tpu.dot_dimension_numbers<[1], [0], [0], [1], [0, 0, 1, 1], [], []>} : vector<8x128xbf16>, vector<128x128xbf16>, vector<8x128xf32> -> vector<8x128xf32>
    %c1 = arith.constant 1 : index
    %c0_9 = arith.constant 0 : index
    %12 = vector.load %arg5[%c1, %c0_9] : memref<8x128xf32, #tpu.memory_space<vmem>>, vector<1x128xf32>
    %13 = vector.broadcast %12 : vector<1x128xf32> to vector<8x128xf32>
    %14 = arith.addf %11, %13 : vector<8x128xf32>
    %cst_10 = arith.constant 0.000000e+00 : f32
    %15 = vector.broadcast %cst_10 : f32 to vector<8x128xf32>
    %16 = arith.maximumf %14, %15 : vector<8x128xf32>
    %17 = arith.truncf %16 : vector<8x128xf32> to vector<8x128xbf16>
    %c0_11 = arith.constant 0 : index
    %c0_12 = arith.constant 0 : index
    %18 = vector.load %arg4[%c0_11, %c0_12] : memref<128x128xbf16, #tpu.memory_space<vmem>>, vector<128x128xbf16>
    %cst_13 = arith.constant dense<0.000000e+00> : vector<8x128xf32>
    %19 = tpu.matmul %17, %18, %cst_13 {dimension_numbers = #tpu.dot_dimension_numbers<[1], [0], [0], [1], [0, 0, 1, 1], [], []>} : vector<8x128xbf16>, vector<128x128xbf16>, vector<8x128xf32> -> vector<8x128xf32>
    %c2 = arith.constant 2 : index
    %c0_14 = arith.constant 0 : index
    %20 = vector.load %arg5[%c2, %c0_14] : memref<8x128xf32, #tpu.memory_space<vmem>>, vector<1x128xf32>
    %21 = vector.broadcast %20 : vector<1x128xf32> to vector<8x128xf32>
    %22 = arith.addf %19, %21 : vector<8x128xf32>
    %23 = math.tanh %22 : vector<8x128xf32>
    %24 = arith.truncf %23 : vector<8x128xf32> to vector<8x128xbf16>
    %c0_15 = arith.constant 0 : index
    %c0_16 = arith.constant 0 : index
    %25 = vector.load %arg6[%c0_15, %c0_16] : memref<8x128xbf16, #tpu.memory_space<vmem>>, vector<8x128xbf16>
    tpu.vector_store %arg6[%c0_15, %c0_16], %24 {strides = array<i32>} : memref<8x128xbf16, #tpu.memory_space<vmem>>, vector<8x128xbf16>,
    return
  }
  func.func @transform_0(%arg0: i32) -> (i32, i32) {
    %c0_i32 = arith.constant 0 : i32
    %c0_i32_0 = arith.constant 0 : i32
    return %arg0, %c0_i32 : i32, i32
  }
  func.func @transform_1(%arg0: i32) -> (i32, i32) {
    %c0_i32 = arith.constant 0 : i32
    %c0_i32_0 = arith.constant 0 : i32
    %c0_i32_1 = arith.constant 0 : i32
    return %c0_i32, %c0_i32_0 : i32, i32
  }
  func.func @transform_2(%arg0: i32) -> (i32, i32) {
    %c0_i32 = arith.constant 0 : i32
    %c0_i32_0 = arith.constant 0 : i32
    %c0_i32_1 = arith.constant 0 : i32
    return %c0_i32, %c0_i32_0 : i32, i32
  }
  func.func @transform_3(%arg0: i32) -> (i32, i32) {
    %c0_i32 = arith.constant 0 : i32
    %c0_i32_0 = arith.constant 0 : i32
    %c0_i32_1 = arith.constant 0 : i32
    return %c0_i32, %c0_i32_0 : i32, i32
  }
  func.func @transform_4(%arg0: i32) -> (i32, i32) {
    %c0_i32 = arith.constant 0 : i32
    %c0_i32_0 = arith.constant 0 : i32
    %c0_i32_1 = arith.constant 0 : i32
    return %c0_i32, %c0_i32_0 : i32, i32
  }
  func.func @transform_5(%arg0: i32) -> (i32, i32) {
    %c0_i32 = arith.constant 0 : i32
    %c0_i32_0 = arith.constant 0 : i32
    return %arg0, %c0_i32 : i32, i32
  }
}

</mosaic_0001>

<llo_original>
// kernel: tpu_custom_call.1
$region0: #{tpu_custom_call.1}
  #allocation0 [shape = 'u32[]', space=smem, size = 0x4, offset = 0x4, fixed_abs, tag = 'smem constant byte address 0x4 - core index']
  #allocation1 [shape = 'u32[144,128]{1,0:T(1,128)}', space=vmem, size = 0x12000, scoped, tag = 'internal scratch']
  %s0 = inlined_call_operand.hbm [shape: f32[8,8], index: 0, kind: input, shape index: {}]
  %s1 = inlined_call_operand.hbm [shape: bf16[8,128], index: 1, kind: input, shape index: {}]
  %s2 = inlined_call_operand.hbm [shape: bf16[128,128], index: 2, kind: input, shape index: {}]
  %s3 = inlined_call_operand.hbm [shape: bf16[128,128], index: 3, kind: input, shape index: {}]
  %s4 = inlined_call_operand.vmem [shape: f32[8,128], index: 4, kind: input, shape index: {}]
  %s5 = inlined_call_operand.hbm [shape: bf16[8,128], index: 5, kind: output, shape index: {}]
  %s6 = sld [smem:[#allocation0]]
  $region46: #{tpu_custom_call.1} parent=0
    _
  %s8 = ssub.s32 1, %s6
  %s9 = scalar_select 0, %s8, %s6
  $region1: #{tpu_custom_call.1} parent=0
    #allocation2 [shape = 'u8[4096]{0}', space=vmem, size = 0x1000, scoped, tag = 'input window, operand 0, single buffered']
    #allocation3 [shape = 's32[1]{0}', space=sflag, size = 0x4, scoped, tag = 'scoped memory for tpu_custom_call.1']
    #allocation4 [shape = 's32[1]{0}', space=sflag, size = 0x4, scoped, tag = 'scoped memory for tpu_custom_call.1']
    #allocation5 [shape = 'u8[2048]{0}', space=vmem, size = 0x800, scoped, tag = 'input window, operand 1, single buffered']
    #allocation6 [shape = 's32[1]{0}', space=sflag, size = 0x4, scoped, tag = 'scoped memory for tpu_custom_call.1']
    #allocation7 [shape = 'u8[32768]{0}', space=vmem, size = 0x8000, scoped, tag = 'input window, operand 2, single buffered']
    #allocation8 [shape = 'u8[32768]{0}', space=vmem, size = 0x8000, scoped, tag = 'input window, operand 3, single buffered']
    #allocation9 [shape = 's32[1]{0}', space=sflag, size = 0x4, scoped, tag = 'scoped memory for tpu_custom_call.1']
    #allocation10 [shape = 'u8[2048]{0}', space=vmem, size = 0x800, scoped, tag = 'output window, operand 0, single buffered']
    %10 = vsyncpa [#allocation3], 0
    %11 = vsyncpa [#allocation6], 0
    %12 = vsyncpa [#allocation9], 0
    %13 = vsyncpa [#allocation4], 0
    // Predicated region
    $region2: #{tpu_custom_call.1} parent=1 // pred_check
      _
    $region3: #{tpu_custom_call.1} parent=1 // pred_check_branch
      %15 = sbr.rel (0) target = $region5
    $region4: #{tpu_custom_call.1} parent=1 // pred_region
      %s17 = ssub.s32 128, 128
      %18 = vsyncadd [#allocation3], %s17
      %s20 = sshll.u32 [#allocation2], 4
      %s21 = int_to_ptr.vmem [resolvable:$true] %s20
      %23 = dma.hbm_to_vmem [thread:$0]  %s0, 128, %s21, [#allocation3]
    $region5: #{tpu_custom_call.1} parent=1 // pred_fallthru
      _
    // Predicated region
    $region6: #{tpu_custom_call.1} parent=1 // pred_check
      _
    $region7: #{tpu_custom_call.1} parent=1 // pred_check_branch
      %25 = sbr.rel (0) target = $region9
    $region8: #{tpu_custom_call.1} parent=1 // pred_region
      %s27 = ssub.s32 64, 64
      %28 = vsyncadd [#allocation6], %s27
      %s30 = sshll.u32 [#allocation5], 4
      %s31 = int_to_ptr.vmem [resolvable:$true] %s30
      %33 = dma.hbm_to_vmem [thread:$0]  %s1, 64, %s31, [#allocation6]
    $region9: #{tpu_custom_call.1} parent=1 // pred_fallthru
      _
    // Predicated region
    $region10: #{tpu_custom_call.1} parent=1 // pred_check
      _
    $region11: #{tpu_custom_call.1} parent=1 // pred_check_branch
      %35 = sbr.rel (0) target = $region13
    $region12: #{tpu_custom_call.1} parent=1 // pred_region
      %s37 = ssub.s32 1024, 1024
      %38 = vsyncadd [#allocation6], %s37
      %s39 = sshll.u32 [#allocation7], 4
      %s40 = int_to_ptr.vmem [resolvable:$true] %s39
      %45 = dma.hbm_to_vmem [thread:$0]  %s2, 1024, %s40, [#allocation6], 64, 64, 4
    $region13: #{tpu_custom_call.1} parent=1 // pred_fallthru
      _
    // Predicated region
    $region14: #{tpu_custom_call.1} parent=1 // pred_check
      _
    $region15: #{tpu_custom_call.1} parent=1 // pred_check_branch
      %47 = sbr.rel (0) target = $region17
    $region16: #{tpu_custom_call.1} parent=1 // pred_region
      %s49 = ssub.s32 1024, 1024
      %50 = vsyncadd [#allocation9], %s49
      %s51 = sshll.u32 [#allocation8], 4
      %s52 = int_to_ptr.vmem [resolvable:$true] %s51
      %57 = dma.hbm_to_vmem [thread:$0]  %s3, 1024, %s52, [#allocation9], 64, 64, 4
    $region17: #{tpu_custom_call.1} parent=1 // pred_fallthru
      _
    // Predicated region
    $region18: #{tpu_custom_call.1} parent=1 // pred_check
      _
    $region19: #{tpu_custom_call.1} parent=1 // pred_check_branch
      %59 = sbr.rel (0) target = $region21
    $region20: #{tpu_custom_call.1} parent=1 // pred_region
      _
    $region21: #{tpu_custom_call.1} parent=1 // pred_fallthru
      _
    // Predicated region
    $region22: #{tpu_custom_call.1} parent=1 // pred_check
      _
    $region23: #{tpu_custom_call.1} parent=1 // pred_check_branch
      %61 = sbr.rel (0) target = $region25
    $region24: #{tpu_custom_call.1} parent=1 // pred_region
      %62 = dma.done [#allocation3], 128
    $region25: #{tpu_custom_call.1} parent=1 // pred_fallthru
      _
    // Predicated region
    $region26: #{tpu_custom_call.1} parent=1 // pred_check
      _
    $region27: #{tpu_custom_call.1} parent=1 // pred_check_branch
      %64 = sbr.rel (0) target = $region29
    $region28: #{tpu_custom_call.1} parent=1 // pred_region
      %65 = dma.done [#allocation6], 64
    $region29: #{tpu_custom_call.1} parent=1 // pred_fallthru
      _
    // Predicated region
    $region30: #{tpu_custom_call.1} parent=1 // pred_check
      _
    $region31: #{tpu_custom_call.1} parent=1 // pred_check_branch
      %67 = sbr.rel (0) target = $region33
    $region32: #{tpu_custom_call.1} parent=1 // pred_region
      %68 = dma.done [#allocation6], 1024
    $region33: #{tpu_custom_call.1} parent=1 // pred_fallthru
      _
    // Predicated region
    $region34: #{tpu_custom_call.1} parent=1 // pred_check
      _
    $region35: #{tpu_custom_call.1} parent=1 // pred_check_branch
      %70 = sbr.rel (0) target = $region37
    $region36: #{tpu_custom_call.1} parent=1 // pred_region
      %71 = dma.done [#allocation9], 1024
    $region37: #{tpu_custom_call.1} parent=1 // pred_fallthru
      _
    %v73 = vld [vmem:[#allocation2] sm:$0xff]
    %v74 = vpack.c.bf16 %v73, %v73
    %v75 = vld [vmem:[#allocation5] sm:$0xf]
    %v76 = vld [vmem:[%s4] sm:$0x1]
    %v77 = vlaneseq
    %v78 = vshrl.u32 %v77, 7
    %v79 = vsub.s32 0, %v78
    %v80 = vrot.slane %v76, %v79
    %vm81 = vcmask 64512
    %v83 = vsel %vm81, %v74, 0
    %vm85 = vcmask 1043456
    %v87 = vsel %vm85, %v75, 0
    %89 = vmatprep.subr.bf16.mxu0 0
    %90 = vmatpush1.bf16.msra.mxu0 %v87
    %91 = vmatprep.subr.bf16.mxu0 0
    %92 = vmatpush1.bf16.msra.mxu0 0
    %93 = vmatprep.subr.bf16.mxu0 0
    %94 = vmatpush1.bf16.msra.mxu0 0
    %95 = vmatprep.subr.bf16.mxu0 0
    %96 = vmatpush1.bf16.msra.mxu0 0
    %97 = vmatprep.subr.bf16.mxu0 0
    %98 = vmatpush1.bf16.msra.mxu0 0
    %99 = vmatprep.subr.bf16.mxu0 0
    %100 = vmatpush1.bf16.msra.mxu0 0
    %101 = vmatprep.subr.bf16.mxu0 0
    %102 = vmatpush1.bf16.msra.mxu0 0
    %103 = vmatprep.subr.bf16.mxu0 0
    %104 = vmatpush1.bf16.msra.mxu0 0
    %105 = vmatprep.subr.bf16.mxu0 0
    %106 = vmatpush1.bf16.msra.mxu0 0
    %107 = vmatprep.subr.bf16.mxu0 0
    %108 = vmatpush1.bf16.msra.mxu0 0
    %109 = vmatprep.subr.bf16.mxu0 0
    %110 = vmatpush1.bf16.msra.mxu0 0
    %111 = vmatprep.subr.bf16.mxu0 0
    %112 = vmatpush1.bf16.msra.mxu0 0
    %113 = vmatprep.subr.bf16.mxu0 0
    %114 = vmatpush1.bf16.msra.mxu0 0
    %115 = vmatprep.subr.bf16.mxu0 0
    %116 = vmatpush1.bf16.msra.mxu0 0
    %117 = vmatprep.subr.bf16.mxu0 0
    %118 = vmatpush1.bf16.msra.mxu0 0
    %119 = vmatprep.subr.bf16.mxu0 0
    %120 = vmatpush1.bf16.msra.mxu0 0
    %121 = vmatprep.mubr.bf16.mxu0 0
    %122 = vmatmul.mubr.bf16.gmra.mrb[0].mxu0 %v83
    %v123 = vpop.f32.mrb[0].mxu0
    %v124 = vadd.f32 %v80, %v123
    %v125 = vpop.f32.mrb[0].mxu0
    %v126 = vpop.f32.mrb[0].mxu0
    %v127 = vpop.f32.mrb[0].mxu0
    %128 = vdwg.mxu0
    %v129 = vmax.f32 %v124, 0.0
    %v130 = vpack.c.bf16 %v129, %v129
    %v131 = vld [vmem:[#allocation7] sm:$0xf]
    %v132 = vld [vmem:[#allocation7 + $0x4] sm:$0xf]
    %v133 = vld [vmem:[#allocation7 + $0x8] sm:$0xf]
    %v134 = vld [vmem:[#allocation7 + $0xc] sm:$0xf]
    %v135 = vld [vmem:[#allocation7 + $0x10] sm:$0xf]
    %v136 = vld [vmem:[#allocation7 + $0x14] sm:$0xf]
    %v137 = vld [vmem:[#allocation7 + $0x18] sm:$0xf]
    %v138 = vld [vmem:[#allocation7 + $0x1c] sm:$0xf]
    %v139 = vld [vmem:[#allocation7 + $0x20] sm:$0xf]
    %v140 = vld [vmem:[#allocation7 + $0x24] sm:$0xf]
    %v141 = vld [vmem:[#allocation7 + $0x28] sm:$0xf]
    %v142 = vld [vmem:[#allocation7 + $0x2c] sm:$0xf]
    %v143 = vld [vmem:[#allocation7 + $0x30] sm:$0xf]
    %v144 = vld [vmem:[#allocation7 + $0x34] sm:$0xf]
    %v145 = vld [vmem:[#allocation7 + $0x38] sm:$0xf]
    %v146 = vld [vmem:[#allocation7 + $0x3c] sm:$0xf]
    %v147 = vld [vmem:[%s4 + $0x1] sm:$0x1]
    %v148 = vlaneseq
    %v149 = vshrl.u32 %v148, 7
    %v150 = vsub.s32 0, %v149
    %v151 = vrot.slane %v147, %v150
    %v168 = vunpack.c.l.b16 %v131
    %v169 = vunpack.c.l.b16 %v132
    %v170 = vunpack.c.l.b16 %v133
    %v171 = vunpack.c.l.b16 %v134
    %v172 = vunpack.c.l.b16 %v135
    %v173 = vunpack.c.l.b16 %v136
    %v174 = vunpack.c.l.b16 %v137
    %v175 = vunpack.c.l.b16 %v138
    %v176 = vunpack.c.l.b16 %v139
    %v177 = vunpack.c.l.b16 %v140
    %v178 = vunpack.c.l.b16 %v141
    %v179 = vunpack.c.l.b16 %v142
    %v180 = vunpack.c.l.b16 %v143
    %v181 = vunpack.c.l.b16 %v144
    %v182 = vunpack.c.l.b16 %v145
    %v183 = vunpack.c.l.b16 %v146
    %v184 = vpack.c.b16 %v169, %v168
    %v185 = vpack.c.b16 %v171, %v170
    %v186 = vpack.c.b16 %v173, %v172
    %v187 = vpack.c.b16 %v175, %v174
    %v188 = vpack.c.b16 %v177, %v176
    %v189 = vpack.c.b16 %v179, %v178
    %v190 = vpack.c.b16 %v181, %v180
    %v191 = vpack.c.b16 %v183, %v182
    %200 = vmatprep.subr.bf16.mxu0 0
    %201 = vmatpush1.bf16.msra.mxu0 %v184
    %202 = vmatprep.subr.bf16.mxu0 0
    %203 = vmatpush1.bf16.msra.mxu0 %v185
    %204 = vmatprep.subr.bf16.mxu0 0
    %205 = vmatpush1.bf16.msra.mxu0 %v186
    %206 = vmatprep.subr.bf16.mxu0 0
    %207 = vmatpush1.bf16.msra.mxu0 %v187
    %208 = vmatprep.subr.bf16.mxu0 0
    %209 = vmatpush1.bf16.msra.mxu0 %v188
    %210 = vmatprep.subr.bf16.mxu0 0
    %211 = vmatpush1.bf16.msra.mxu0 %v189
    %212 = vmatprep.subr.bf16.mxu0 0
    %213 = vmatpush1.bf16.msra.mxu0 %v190
    %214 = vmatprep.subr.bf16.mxu0 0
    %215 = vmatpush1.bf16.msra.mxu0 %v191
    %216 = vmatprep.subr.bf16.mxu0 0
    %217 = vmatpush1.bf16.msra.mxu0 0
    %218 = vmatprep.subr.bf16.mxu0 0
    %219 = vmatpush1.bf16.msra.mxu0 0
    %220 = vmatprep.subr.bf16.mxu0 0
    %221 = vmatpush1.bf16.msra.mxu0 0
    %222 = vmatprep.subr.bf16.mxu0 0
    %223 = vmatpush1.bf16.msra.mxu0 0
    %224 = vmatprep.subr.bf16.mxu0 0
    %225 = vmatpush1.bf16.msra.mxu0 0
    %226 = vmatprep.subr.bf16.mxu0 0
    %227 = vmatpush1.bf16.msra.mxu0 0
    %228 = vmatprep.subr.bf16.mxu0 0
    %229 = vmatpush1.bf16.msra.mxu0 0
    %230 = vmatprep.subr.bf16.mxu0 0
    %231 = vmatpush1.bf16.msra.mxu0 0
    %232 = vmatprep.mubr.bf16.mxu0 0
    %233 = vmatmul.mubr.bf16.gmra.mrb[0].mxu0 %v130
    %v234 = vpop.f32.mrb[0].mxu0
    %v235 = vadd.f32 %v151, %v234
    %v236 = vpop.f32.mrb[0].mxu0
    %v237 = vpop.f32.mrb[0].mxu0
    %v238 = vpop.f32.mrb[0].mxu0
    %239 = vdwg.mxu0
    %v240 = vmax.f32 %v235, 0.0
    %v241 = vpack.c.bf16 %v240, %v240
    %v242 = vld [vmem:[#allocation8] sm:$0xf]
    %v243 = vld [vmem:[#allocation8 + $0x4] sm:$0xf]
    %v244 = vld [vmem:[#allocation8 + $0x8] sm:$0xf]
    %v245 = vld [vmem:[#allocation8 + $0xc] sm:$0xf]
    %v246 = vld [vmem:[#allocation8 + $0x10] sm:$0xf]
    %v247 = vld [vmem:[#allocation8 + $0x14] sm:$0xf]
    %v248 = vld [vmem:[#allocation8 + $0x18] sm:$0xf]
    %v249 = vld [vmem:[#allocation8 + $0x1c] sm:$0xf]
    %v250 = vld [vmem:[#allocation8 + $0x20] sm:$0xf]
    %v251 = vld [vmem:[#allocation8 + $0x24] sm:$0xf]
    %v252 = vld [vmem:[#allocation8 + $0x28] sm:$0xf]
    %v253 = vld [vmem:[#allocation8 + $0x2c] sm:$0xf]
    %v254 = vld [vmem:[#allocation8 + $0x30] sm:$0xf]
    %v255 = vld [vmem:[#allocation8 + $0x34] sm:$0xf]
    %v256 = vld [vmem:[#allocation8 + $0x38] sm:$0xf]
    %v257 = vld [vmem:[#allocation8 + $0x3c] sm:$0xf]
    %v258 = vld [vmem:[%s4 + $0x2] sm:$0x1]
    %v259 = vlaneseq
    %v260 = vshrl.u32 %v259, 7
    %v261 = vsub.s32 0, %v260
    %v262 = vrot.slane %v258, %v261
    %v279 = vunpack.c.l.b16 %v242
    %v280 = vunpack.c.l.b16 %v243
    %v281 = vunpack.c.l.b16 %v244
    %v282 = vunpack.c.l.b16 %v245
    %v283 = vunpack.c.l.b16 %v246
    %v284 = vunpack.c.l.b16 %v247
    %v285 = vunpack.c.l.b16 %v248
    %v286 = vunpack.c.l.b16 %v249
    %v287 = vunpack.c.l.b16 %v250
    %v288 = vunpack.c.l.b16 %v251
    %v289 = vunpack.c.l.b16 %v252
    %v290 = vunpack.c.l.b16 %v253
    %v291 = vunpack.c.l.b16 %v254
    %v292 = vunpack.c.l.b16 %v255
    %v293 = vunpack.c.l.b16 %v256
    %v294 = vunpack.c.l.b16 %v257
    %v295 = vpack.c.b16 %v280, %v279
    %v296 = vpack.c.b16 %v282, %v281
    %v297 = vpack.c.b16 %v284, %v283
    %v298 = vpack.c.b16 %v286, %v285
    %v299 = vpack.c.b16 %v288, %v287
    %v300 = vpack.c.b16 %v290, %v289
    %v301 = vpack.c.b16 %v292, %v291
    %v302 = vpack.c.b16 %v294, %v293
    %311 = vmatprep.subr.bf16.mxu0 0
    %312 = vmatpush1.bf16.msra.mxu0 %v295
    %313 = vmatprep.subr.bf16.mxu0 0
    %314 = vmatpush1.bf16.msra.mxu0 %v296
    %315 = vmatprep.subr.bf16.mxu0 0
    %316 = vmatpush1.bf16.msra.mxu0 %v297
    %317 = vmatprep.subr.bf16.mxu0 0
    %318 = vmatpush1.bf16.msra.mxu0 %v298
    %319 = vmatprep.subr.bf16.mxu0 0
    %320 = vmatpush1.bf16.msra.mxu0 %v299
    %321 = vmatprep.subr.bf16.mxu0 0
    %322 = vmatpush1.bf16.msra.mxu0 %v300
    %323 = vmatprep.subr.bf16.mxu0 0
    %324 = vmatpush1.bf16.msra.mxu0 %v301
    %325 = vmatprep.subr.bf16.mxu0 0
    %326 = vmatpush1.bf16.msra.mxu0 %v302
    %327 = vmatprep.subr.bf16.mxu0 0
    %328 = vmatpush1.bf16.msra.mxu0 0
    %329 = vmatprep.subr.bf16.mxu0 0
    %330 = vmatpush1.bf16.msra.mxu0 0
    %331 = vmatprep.subr.bf16.mxu0 0
    %332 = vmatpush1.bf16.msra.mxu0 0
    %333 = vmatprep.subr.bf16.mxu0 0
    %334 = vmatpush1.bf16.msra.mxu0 0
    %335 = vmatprep.subr.bf16.mxu0 0
    %336 = vmatpush1.bf16.msra.mxu0 0
    %337 = vmatprep.subr.bf16.mxu0 0
    %338 = vmatpush1.bf16.msra.mxu0 0
    %339 = vmatprep.subr.bf16.mxu0 0
    %340 = vmatpush1.bf16.msra.mxu0 0
    %341 = vmatprep.subr.bf16.mxu0 0
    %342 = vmatpush1.bf16.msra.mxu0 0
    %343 = vmatprep.mubr.bf16.mxu0 0
    %344 = vmatmul.mubr.bf16.gmra.mrb[0].mxu0 %v241
    %v345 = vpop.f32.mrb[0].mxu0
    %v346 = vadd.f32 %v262, %v345
    %v347 = vpop.f32.mrb[0].mxu0
    %v348 = vpop.f32.mrb[0].mxu0
    %v349 = vpop.f32.mrb[0].mxu0
    %350 = vdwg.mxu0
    %v351 = vtanh.pop %v346
    %v352 = vpack.c.bf16 %v351, %v351
    %353 = vst [vmem:[#allocation10] sm:$0xf] %v352
    // Predicated region
    $region38: #{tpu_custom_call.1} parent=1 // pred_check
      _
    $region39: #{tpu_custom_call.1} parent=1 // pred_check_branch
      %355 = sbr.rel (0) target = $region41
    $region40: #{tpu_custom_call.1} parent=1 // pred_region
      %s357 = ssub.s32 64, 64
      %358 = vsyncadd [#allocation4], %s357
      %s360 = sshll.u32 [#allocation10], 4
      %s361 = int_to_ptr.vmem [resolvable:$true] %s360
      %363 = dma.vmem_to_hbm [thread:$0]  %s361, 64, %s5, [#allocation4]
    $region41: #{tpu_custom_call.1} parent=1 // pred_fallthru
      _
    // Predicated region
    $region42: #{tpu_custom_call.1} parent=1 // pred_check
      _
    $region43: #{tpu_custom_call.1} parent=1 // pred_check_branch
      %365 = sbr.rel (0) target = $region45
    $region44: #{tpu_custom_call.1} parent=1 // pred_region
      %366 = dma.done [#allocation4], 64
    $region45: #{tpu_custom_call.1} parent=1 // pred_fallthru
      _
    %367 = vsyncpa [#allocation3], 1
    %368 = vsyncpa [#allocation6], 1
    %369 = vsyncpa [#allocation9], 1
    %370 = vsyncpa [#allocation4], 1

</llo_original>
